<compile_context>
chip_gen: v5e
topology: v5e:2x2
jax: 0.10.0
libtpu: 0.0.40
codegen_flags: <defaults>
</compile_context>

<pallas_src>
import functools
import math

import jax
import jax.numpy as jnp
from jax import lax
from jax.experimental import pallas as pl
from jax.experimental.pallas import tpu as pltpu


def _round_up(x, m):
    return (x + m - 1) // m * m


def _cdiv(a, b):
    return -(-a // b)


def _adaptive_tiles(S, block_s):
    """Pick tile_s so that S-padding stays small (not padded up to block_s)."""
    n_chunks = max(1, _cdiv(S, block_s))
    tile_s = _round_up(_cdiv(S, n_chunks), 8)
    n_tiles = _cdiv(S, tile_s)
    s_pad = n_tiles * tile_s
    return tile_s, n_tiles, s_pad


# --------------------------------------------------------------------------
# Phase 1: fused QKV projection + per-core partial score accumulation
# --------------------------------------------------------------------------
def _qkv_scores_kernel(x_ref, w_ref, b_ref, v_ref, scores_ref, acc_ref, *,
                       d_pad, tile_s, tiles_per_core, n_tiles_total,
                       valid_in_last_tile, mask_rows, score_dtype):
    c = pl.program_id(0)          # core / score-partial index ("parallel")
    i = pl.program_id(1)          # S-tile within this core ("arbitrary")

    @pl.when(i == 0)
    def _():
        acc_ref[...] = jnp.zeros_like(acc_ref)

    # Fused Q/K/V projection: single MXU matmul on the concatenated weight.
    qkv = jnp.dot(x_ref[...], w_ref[...],
                  preferred_element_type=jnp.float32) + b_ref[...]
    # 1/sqrt(d_k) already folded into Wq/bq. Cast Q/K to the compute dtype
    # (bf16 fast path) before the scores matmul; accumulation stays f32.
    q = qkv[:, 0:d_pad].astype(score_dtype)
    k = qkv[:, d_pad:2 * d_pad].astype(score_dtype)
    v = qkv[:, 2 * d_pad:3 * d_pad]

    v_ref[...] = v.astype(v_ref.dtype)

    def accumulate(q_op):
        # scores += Q^T K : contract over the S (row) axis -- no XLU transpose.
        acc_ref[...] += lax.dot_general(
            q_op, k, dimension_numbers=(((0,), (0,)), ((), ())),
            preferred_element_type=jnp.float32)

    if mask_rows:
        # Rows past the true sequence length must not contribute to Q^T K
        # (the bias makes zero-padded x rows non-neutral).  Only the last
        # global tile contains padded rows, so gate the mask with pl.when.
        is_last = (c * tiles_per_core + i) == (n_tiles_total - 1)

        @pl.when(is_last)
        def _():
            row = lax.broadcasted_iota(jnp.int32, (tile_s, 1), 0)
            accumulate(jnp.where(row < valid_in_last_tile, q,
                                 jnp.zeros_like(q)))

        @pl.when(jnp.logical_not(is_last))
        def _():
            accumulate(q)
    else:
        accumulate(q)

    @pl.when(i == tiles_per_core - 1)
    def _():
        scores_ref[0] = acc_ref[...]


# --------------------------------------------------------------------------
# Combine partial scores + softmax + fold A into the output projection
# --------------------------------------------------------------------------
def _softmax_fold_kernel(scores_ref, wo_ref, w2_ref, *,
                         d_k, d_pad, mm_dtype, approx_recip):
    s = jnp.sum(scores_ref[...], axis=0)          # (d_pad, d_pad), f32
    # Padded key columns must not perturb the softmax normalization
    # (mask applied in f32, before any downcast).
    col = lax.broadcasted_iota(jnp.int32, (d_pad, d_pad), 1)
    s = jnp.where(col < d_k, s, -1e30)
    m = jnp.max(s, axis=-1, keepdims=True)
    p = jnp.exp(s - m)
    denom = jnp.sum(p, axis=-1, keepdims=True)
    a = p * pl.reciprocal(denom, approx=approx_recip)
    # W2 = A^T @ Wo_p : contract A's row axis with Wo_p's rows (no transpose).
    # Padded A rows hit zero Wo_p rows -> numerics unchanged.
    w2 = lax.dot_general(
        a.astype(mm_dtype), wo_ref[...],
        dimension_numbers=(((0,), (0,)), ((), ())),
        preferred_element_type=jnp.float32)
    w2_ref[...] = w2.astype(w2_ref.dtype)


# --------------------------------------------------------------------------
# Phase 2: out = V @ W2 + bo  (single matmul per S-tile, megacore parallel)
# --------------------------------------------------------------------------
def _out_proj_kernel(v_ref, w2_ref, bo_ref, o_ref):
    out = jnp.dot(v_ref[...], w2_ref[...],
                  preferred_element_type=jnp.float32) + bo_ref[...]
    o_ref[...] = out.astype(o_ref.dtype)


# --------------------------------------------------------------------------
# Wrappers
# --------------------------------------------------------------------------
def prepare_mha_params(wq, bq, wk, bk, wv, bv, wo, bo, *,
                       compute_dtype=jnp.bfloat16):
    """Build fused, lane-padded, pre-cast weight tensors ONCE (reusable).

    Returns (w_qkv, b_qkv, wo_p, bo2):
      w_qkv: (d_model, 3*d_pad) compute_dtype, 1/sqrt(d_k) folded into Wq part
      b_qkv: (1, 3*d_pad) f32, 1/sqrt(d_k) folded into bq part
      wo_p : (d_pad, d_model) compute_dtype, padded d_v rows zero
      bo2  : (1, d_model) f32
    """
    d_k, d_model = wq.shape
    d_v = wv.shape[0]
    assert d_k == d_v, "ScaledDotProductAttn requires d_k == d_v"

    LANE = 128
    d_pad = _round_up(d_k, LANE)
    f32 = jnp.float32
    scale = 1.0 / math.sqrt(float(d_k))

    w_qkv = jnp.zeros((d_model, 3 * d_pad), f32)
    w_qkv = w_qkv.at[:, 0:d_k].set((wq * scale).T.astype(f32))
    w_qkv = w_qkv.at[:, d_pad:d_pad + d_k].set(wk.T.astype(f32))
    w_qkv = w_qkv.at[:, 2 * d_pad:2 * d_pad + d_v].set(wv.T.astype(f32))

    b_qkv = jnp.zeros((1, 3 * d_pad), f32)
    b_qkv = b_qkv.at[0, 0:d_k].set((bq * scale).astype(f32))
    b_qkv = b_qkv.at[0, d_pad:d_pad + d_k].set(bk.astype(f32))
    b_qkv = b_qkv.at[0, 2 * d_pad:2 * d_pad + d_v].set(bv.astype(f32))

    wo_p = jnp.zeros((d_pad, d_model), f32).at[:d_v, :].set(wo.T.astype(f32))
    bo2 = bo.reshape(1, d_model).astype(f32)

    return (w_qkv.astype(compute_dtype), b_qkv,
            wo_p.astype(compute_dtype), bo2)


def multi_head_attn_prepared(x, w_qkv, b_qkv, wo_p, bo, *, d_k,
                             block_s=1024, compute_dtype=jnp.bfloat16,
                             out_dtype=None,
                             vmem_limit_bytes=48 * 1024 * 1024):
    """x: (S, d_model); weights already fused/padded by prepare_mha_params.

    block_s: max S-tile size (adaptive tiling keeps padding small).  ~1024-2048
    rows works across v5e/v6e/v7x with the explicit vmem_limit_bytes below.
    compute_dtype: matmul-operand dtype (bf16 = native MXU dtype; accumulation
    and softmax are always f32).  out_dtype: output dtype (bf16 roughly halves
    the HBM-store-bound phase-2 time if downstream tolerates it).
    """
    S, d_model = x.shape
    d_pad = w_qkv.shape[1] // 3
    out_dtype = x.dtype if out_dtype is None else out_dtype

    tile_s, n_tiles, s_pad = _adaptive_tiles(S, block_s)
    # Split the phase-1 reduction over S into 2 "parallel" groups when possible
    # so v7x can shard it across both TensorCores (harmless serial loop on
    # single-TC chips).
    n_cores = 2 if (n_tiles >= 2 and n_tiles % 2 == 0) else 1
    tiles_per_core = n_tiles // n_cores

    mask_rows = (s_pad != S)
    valid_in_last_tile = S - (n_tiles - 1) * tile_s
    score_dtype = jnp.dtype(compute_dtype)
    approx_recip = score_dtype != jnp.dtype(jnp.float32)

    x_p = x if s_pad == S else jnp.pad(x, ((0, s_pad - S), (0, 0)))
    x_c = x_p.astype(compute_dtype)

    # ---- Phase 1: fused QKV projection + partial score accumulation ----
    v_full, partial_scores = pl.pallas_call(
        functools.partial(
            _qkv_scores_kernel, d_pad=d_pad, tile_s=tile_s,
            tiles_per_core=tiles_per_core, n_tiles_total=n_tiles,
            valid_in_last_tile=valid_in_last_tile, mask_rows=mask_rows,
            score_dtype=score_dtype),
        out_shape=(jax.ShapeDtypeStruct((s_pad, d_pad), compute_dtype),
                   jax.ShapeDtypeStruct((n_cores, d_pad, d_pad), jnp.float32)),
        grid_spec=pltpu.PrefetchScalarGridSpec(
            num_scalar_prefetch=0,
            grid=(n_cores, tiles_per_core),
            in_specs=[
                pl.BlockSpec((tile_s, d_model),
                             lambda c, i: (c * tiles_per_core + i, 0)),
                pl.BlockSpec((d_model, 3 * d_pad), lambda c, i: (0, 0)),
                pl.BlockSpec((1, 3 * d_pad), lambda c, i: (0, 0)),
            ],
            out_specs=[
                pl.BlockSpec((tile_s, d_pad),
                             lambda c, i: (c * tiles_per_core + i, 0)),
                pl.BlockSpec((1, d_pad, d_pad), lambda c, i: (c, 0, 0)),
            ],
            scratch_shapes=[pltpu.VMEM((d_pad, d_pad), jnp.float32)]),
        compiler_params=pltpu.CompilerParams(
            dimension_semantics=("parallel", "arbitrary"),
            vmem_limit_bytes=vmem_limit_bytes),
    )(x_c, w_qkv, b_qkv)

    # ---- Combine + softmax + fold A into Wo: W2 = A^T @ Wo_p ----
    w2 = pl.pallas_call(
        functools.partial(_softmax_fold_kernel, d_k=d_k, d_pad=d_pad,
                          mm_dtype=score_dtype, approx_recip=approx_recip),
        out_shape=jax.ShapeDtypeStruct((d_pad, d_model), compute_dtype),
        grid_spec=pltpu.PrefetchScalarGridSpec(
            num_scalar_prefetch=0,
            grid=(1,),
            in_specs=[pl.BlockSpec((n_cores, d_pad, d_pad),
                                   lambda i: (0, 0, 0)),
                      pl.BlockSpec((d_pad, d_model), lambda i: (0, 0))],
            out_specs=pl.BlockSpec((d_pad, d_model), lambda i: (0, 0))),
        compiler_params=pltpu.CompilerParams(
            dimension_semantics=("arbitrary",),
            vmem_limit_bytes=vmem_limit_bytes),
    )(partial_scores, wo_p)

    # ---- Phase 2: out = V @ W2 + bo, S-parallel, single matmul per tile ----
    out = pl.pallas_call(
        _out_proj_kernel,
        out_shape=jax.ShapeDtypeStruct((s_pad, d_model), out_dtype),
        grid_spec=pltpu.PrefetchScalarGridSpec(
            num_scalar_prefetch=0,
            grid=(n_tiles,),
            in_specs=[pl.BlockSpec((tile_s, d_pad), lambda i: (i, 0)),
                      pl.BlockSpec((d_pad, d_model), lambda i: (0, 0)),
                      pl.BlockSpec((1, d_model), lambda i: (0, 0))],
            out_specs=pl.BlockSpec((tile_s, d_model), lambda i: (i, 0))),
        compiler_params=pltpu.CompilerParams(
            dimension_semantics=("parallel",),
            vmem_limit_bytes=vmem_limit_bytes),
    )(v_full, w2, bo)

    # Padded output rows carry garbage (padded V rows contain the bias);
    # slicing them off is required for correctness.
    return out if s_pad == S else out[:S]


def multi_head_attn(x, wq, bq, wk, bk, wv, bv, wo, bo, *,
                    block_s=1024, compute_dtype=jnp.bfloat16,
                    out_dtype=None, vmem_limit_bytes=48 * 1024 * 1024):
    """Convenience wrapper: prepares fused weights then runs the kernels.
    For repeated calls with the same weights, call prepare_mha_params once
    and use multi_head_attn_prepared directly."""
    params = prepare_mha_params(wq, bq, wk, bk, wv, bv, wo, bo,
                                compute_dtype=compute_dtype)
    return multi_head_attn_prepared(
        x, *params, d_k=wq.shape[0], block_s=block_s,
        compute_dtype=compute_dtype, out_dtype=out_dtype,
        vmem_limit_bytes=vmem_limit_bytes)


def _reference(x, wq, bq, wk, bk, wv, bv, wo, bo):
    q = x @ wq.T + bq
    k = x @ wk.T + bk
    v = x @ wv.T + bv
    s = (q.T @ k) / jnp.sqrt(jnp.float32(k.shape[-1]))
    a = jax.nn.softmax(s, axis=-1)
    head = (a @ v.T).T
    return head @ wo.T + bo


if __name__ == "__main__":
    # Small shapes consistent with the module (d_model, d_k=d_v scaled down).
    S, d_model, d_k, d_v = 8, 32, 16, 16

    key = jax.random.PRNGKey(0)
    ks = jax.random.split(key, 10)
    x = jax.random.normal(ks[0], (S, d_model), dtype=jnp.float32)

    def lin_init(kw, kb, out_f, in_f):
        bound = 1.0 / math.sqrt(in_f)
        w = jax.random.uniform(kw, (out_f, in_f), jnp.float32, -bound, bound)
        b = jax.random.uniform(kb, (out_f,), jnp.float32, -bound, bound)
        return w, b

    wq, bq = lin_init(ks[1], ks[2], d_k, d_model)
    wk, bk = lin_init(ks[3], ks[4], d_k, d_model)
    wv, bv = lin_init(ks[5], ks[6], d_v, d_model)
    wo, bo = lin_init(ks[7], ks[8], d_model, d_v)

    ref = _reference(x, wq, bq, wk, bk, wv, bv, wo, bo)

    # Exact-parity path (f32 matmul operands, exact reciprocal, f32 output).
    out_f32 = multi_head_attn(x, wq, bq, wk, bk, wv, bv, wo, bo,
                              compute_dtype=jnp.float32)
    out_f32 = jax.block_until_ready(out_f32)
    assert out_f32.shape == (S, d_model)
    assert jnp.allclose(out_f32, ref, atol=1e-4, rtol=1e-4), "f32 mismatch"

    # Fast path: bf16 MXU operands everywhere, f32 accumulation + softmax,
    # bf16 output (halves phase-2 HBM stores).
    out_bf16 = multi_head_attn(x, wq, bq, wk, bk, wv, bv, wo, bo,
                               compute_dtype=jnp.bfloat16,
                               out_dtype=jnp.bfloat16)
    out_bf16 = jax.block_until_ready(out_bf16)
    assert out_bf16.shape == (S, d_model)
    assert jnp.allclose(out_bf16.astype(jnp.float32), ref,
                        atol=5e-2, rtol=5e-2), "bf16 mismatch"

    # Multi-tile path: exercises the 2-way "parallel" phase-1 split, score
    # accumulation across tiles, and the gated padded-row mask (S=28 -> 4 tiles
    # of 8 rows, 4 padded rows in the last tile).
    S2 = 28
    x2 = jax.random.normal(ks[9], (S2, d_model), dtype=jnp.float32)
    ref2 = _reference(x2, wq, bq, wk, bk, wv, bv, wo, bo)
    out2 = multi_head_attn(x2, wq, bq, wk, bk, wv, bv, wo, bo,
                           block_s=8, compute_dtype=jnp.float32)
    out2 = jax.block_until_ready(out2)
    assert out2.shape == (S2, d_model)
    assert jnp.allclose(out2, ref2, atol=1e-4, rtol=1e-4), "tiled f32 mismatch"

    # Prepared-weights reuse path (weight fusion hoisted out of the call).
    prep = prepare_mha_params(wq, bq, wk, bk, wv, bv, wo, bo,
                              compute_dtype=jnp.bfloat16)
    out3 = multi_head_attn_prepared(x2, *prep, d_k=d_k, block_s=8,
                                    compute_dtype=jnp.bfloat16,
                                    out_dtype=jnp.bfloat16)
    out3 = jax.block_until_ready(out3)
    assert out3.shape == (S2, d_model)
    assert jnp.allclose(out3.astype(jnp.float32), ref2,
                        atol=5e-2, rtol=5e-2), "tiled bf16 mismatch"

    print("KERNEL_OK")
</pallas_src>

<mosaic_0001>
module attributes {stable_mosaic.version = 11 : i64} {
  func.func @_qkv_scores_kernel(%arg0: i32, %arg1: i32, %arg2: memref<8x32xf32, #tpu.memory_space<vmem>>, %arg3: memref<32x384xf32, #tpu.memory_space<vmem>>, %arg4: memref<1x384xf32, #tpu.memory_space<vmem>>, %arg5: memref<8x128xf32, #tpu.memory_space<vmem>>, %arg6: memref<1x128x128xf32, #tpu.memory_space<vmem>>, %arg7: memref<128x128xf32, #tpu.memory_space<vmem>>) attributes {dimension_semantics = [#tpu.dimension_semantics<parallel>, #tpu.dimension_semantics<arbitrary>], iteration_bounds = array<i64: 1, 1>, scalar_prefetch = 0 : i64, scratch_operands = 1 : i64, tpu.core_type = #tpu.core_type<tc>, window_params = [{transform_indices = @transform_0, window_bounds = array<i64: 8, 32>}, {pipeline_mode = #tpu.pipeline_mode<synchronous>, transform_indices = @transform_1, window_bounds = array<i64: 32, 384>}, {pipeline_mode = #tpu.pipeline_mode<synchronous>, transform_indices = @transform_2, window_bounds = array<i64: 1, 384>}, {transform_indices = @transform_3, window_bounds = array<i64: 8, 128>}, {transform_indices = @transform_4, window_bounds = array<i64: 1, 128, 128>}]} {
    %c0_i32 = arith.constant 0 : i32
    %0 = arith.cmpi eq, %arg1, %c0_i32 : i32
    %1 = arith.extui %0 : i1 to i32
    %c0_i32_0 = arith.constant 0 : i32
    %2 = arith.cmpi ne, %1, %c0_i32_0 : i32
    scf.if %2 {
      %cst_15 = arith.constant 0.000000e+00 : f32
      %20 = vector.broadcast %cst_15 : f32 to vector<128x128xf32>
      %c0_16 = arith.constant 0 : index
      %c0_17 = arith.constant 0 : index
      %21 = vector.load %arg7[%c0_16, %c0_17] : memref<128x128xf32, #tpu.memory_space<vmem>>, vector<128x128xf32>
      tpu.vector_store %arg7[%c0_16, %c0_17], %20 {strides = array<i32>} : memref<128x128xf32, #tpu.memory_space<vmem>>, vector<128x128xf32>,
    } else {
    }
    %c0 = arith.constant 0 : index
    %c0_1 = arith.constant 0 : index
    %3 = vector.load %arg2[%c0, %c0_1] : memref<8x32xf32, #tpu.memory_space<vmem>>, vector<8x32xf32>
    %c0_2 = arith.constant 0 : index
    %c0_3 = arith.constant 0 : index
    %4 = vector.load %arg3[%c0_2, %c0_3] : memref<32x384xf32, #tpu.memory_space<vmem>>, vector<32x384xf32>
    %cst = arith.constant dense<0.000000e+00> : vector<8x384xf32>
    %5 = tpu.matmul %3, %4, %cst {dimension_numbers = #tpu.dot_dimension_numbers<[1], [0], [0], [1], [0, 0, 1, 1], [], []>} : vector<8x32xf32>, vector<32x384xf32>, vector<8x384xf32> -> vector<8x384xf32>
    %c0_4 = arith.constant 0 : index
    %c0_5 = arith.constant 0 : index
    %6 = vector.load %arg4[%c0_4, %c0_5] : memref<1x384xf32, #tpu.memory_space<vmem>>, vector<1x384xf32>
    %7 = vector.broadcast %6 : vector<1x384xf32> to vector<8x384xf32>
    %8 = arith.addf %5, %7 : vector<8x384xf32>
    %9 = vector.extract_strided_slice %8 {offsets = [0, 0], sizes = [8, 128], strides = [1, 1]} : vector<8x384xf32> to vector<8x128xf32>
    %10 = vector.extract_strided_slice %8 {offsets = [0, 128], sizes = [8, 128], strides = [1, 1]} : vector<8x384xf32> to vector<8x128xf32>
    %11 = vector.extract_strided_slice %8 {offsets = [0, 256], sizes = [8, 128], strides = [1, 1]} : vector<8x384xf32> to vector<8x128xf32>
    %c0_6 = arith.constant 0 : index
    %c0_7 = arith.constant 0 : index
    %12 = vector.load %arg5[%c0_6, %c0_7] : memref<8x128xf32, #tpu.memory_space<vmem>>, vector<8x128xf32>
    tpu.vector_store %arg5[%c0_6, %c0_7], %11 {strides = array<i32>} : memref<8x128xf32, #tpu.memory_space<vmem>>, vector<8x128xf32>,
    %c0_8 = arith.constant 0 : index
    %c0_9 = arith.constant 0 : index
    %13 = vector.load %arg7[%c0_8, %c0_9] : memref<128x128xf32, #tpu.memory_space<vmem>>, vector<128x128xf32>
    %cst_10 = arith.constant dense<0.000000e+00> : vector<128x128xf32>
    %14 = tpu.matmul %9, %10, %cst_10 {dimension_numbers = #tpu.dot_dimension_numbers<[0], [0], [1], [1], [0, 1, 1, 1], [], []>} : vector<8x128xf32>, vector<8x128xf32>, vector<128x128xf32> -> vector<128x128xf32>
    %15 = arith.addf %13, %14 : vector<128x128xf32>
    %c0_11 = arith.constant 0 : index
    %c0_12 = arith.constant 0 : index
    %16 = vector.load %arg7[%c0_11, %c0_12] : memref<128x128xf32, #tpu.memory_space<vmem>>, vector<128x128xf32>
    tpu.vector_store %arg7[%c0_11, %c0_12], %15 {strides = array<i32>} : memref<128x128xf32, #tpu.memory_space<vmem>>, vector<128x128xf32>,
    %c0_i32_13 = arith.constant 0 : i32
    %17 = arith.cmpi eq, %arg1, %c0_i32_13 : i32
    %18 = arith.extui %17 : i1 to i32
    %c0_i32_14 = arith.constant 0 : i32
    %19 = arith.cmpi ne, %18, %c0_i32_14 : i32
    scf.if %19 {
      %c0_15 = arith.constant 0 : index
      %c0_16 = arith.constant 0 : index
      %20 = vector.load %arg7[%c0_15, %c0_16] : memref<128x128xf32, #tpu.memory_space<vmem>>, vector<128x128xf32>
      %c0_17 = arith.constant 0 : index
      %c0_18 = arith.constant 0 : index
      %c0_19 = arith.constant 0 : index
      %21 = vector.load %arg6[%c0_17, %c0_18, %c0_19] : memref<1x128x128xf32, #tpu.memory_space<vmem>>, vector<1x128x128xf32>
      %22 = vector.shape_cast %21 : vector<1x128x128xf32> to vector<128x128xf32>
      %23 = vector.shape_cast %20 : vector<128x128xf32> to vector<1x128x128xf32>
      tpu.vector_store %arg6[%c0_17, %c0_18, %c0_19], %23 {strides = array<i32>} : memref<1x128x128xf32, #tpu.memory_space<vmem>>, vector<1x128x128xf32>,
    } else {
    }
    return
  }
  func.func @transform_0(%arg0: i32, %arg1: i32) -> (i32, i32) {
    %c1_i32 = arith.constant 1 : i32
    %0 = arith.muli %arg0, %c1_i32 : i32
    %1 = arith.addi %0, %arg1 : i32
    %c0_i32 = arith.constant 0 : i32
    %c0_i32_0 = arith.constant 0 : i32
    return %1, %c0_i32 : i32, i32
  }
  func.func @transform_1(%arg0: i32, %arg1: i32) -> (i32, i32) {
    %c0_i32 = arith.constant 0 : i32
    %c0_i32_0 = arith.constant 0 : i32
    %c0_i32_1 = arith.constant 0 : i32
    return %c0_i32, %c0_i32_0 : i32, i32
  }
  func.func @transform_2(%arg0: i32, %arg1: i32) -> (i32, i32) {
    %c0_i32 = arith.constant 0 : i32
    %c0_i32_0 = arith.constant 0 : i32
    %c0_i32_1 = arith.constant 0 : i32
    return %c0_i32, %c0_i32_0 : i32, i32
  }
  func.func @transform_3(%arg0: i32, %arg1: i32) -> (i32, i32) {
    %c1_i32 = arith.constant 1 : i32
    %0 = arith.muli %arg0, %c1_i32 : i32
    %1 = arith.addi %0, %arg1 : i32
    %c0_i32 = arith.constant 0 : i32
    %c0_i32_0 = arith.constant 0 : i32
    return %1, %c0_i32 : i32, i32
  }
  func.func @transform_4(%arg0: i32, %arg1: i32) -> (i32, i32, i32) {
    %c0_i32 = arith.constant 0 : i32
    %c0_i32_0 = arith.constant 0 : i32
    %c0_i32_1 = arith.constant 0 : i32
    return %arg0, %c0_i32, %c0_i32_0 : i32, i32, i32
  }
}

</mosaic_0001>

<llo_original>
// kernel: tpu_custom_call.1
$region0: #{tpu_custom_call.1}
  #allocation0 [shape = 'u32[]', space=smem, size = 0x4, offset = 0x4, fixed_abs, tag = 'smem constant byte address 0x4 - core index']
  #allocation1 [shape = 'u32[72,128]{1,0:T(1,128)}', space=vmem, size = 0x9000, scoped, tag = 'internal scratch']
  #allocation2 [shape = 'f32[128,128]{1,0:T(8,128)}', space=vmem, size = 0x10000, scoped, tag = 'scratch operand']
  %s0 = inlined_call_operand.hbm [shape: f32[8,32], index: 0, kind: input, shape index: {}]
  %s1 = inlined_call_operand.hbm [shape: f32[32,384], index: 1, kind: input, shape index: {}]
  %s2 = inlined_call_operand.hbm [shape: f32[1,384], index: 2, kind: input, shape index: {}]
  %s3 = inlined_call_operand.hbm [shape: f32[8,128], index: 3, kind: output, shape index: {0}]
  %s4 = inlined_call_operand.hbm [shape: f32[1,128,128], index: 4, kind: output, shape index: {1}]
  %5 = xla_tuple %s3, %s4
  %s6 = sld [smem:[#allocation0]]
  $region50: #{tpu_custom_call.1} parent=0
    _
  %s8 = ssub.s32 1, %s6
  %s9 = scalar_select 0, %s8, %s6
  $region1: #{tpu_custom_call.1} parent=0
    #allocation3 [shape = 'u8[4096]{0}', space=vmem, size = 0x1000, scoped, tag = 'input window, operand 0, single buffered']
    #allocation4 [shape = 's32[1]{0}', space=sflag, size = 0x4, scoped, tag = 'scoped memory for tpu_custom_call.1']
    #allocation5 [shape = 's32[1]{0}', space=sflag, size = 0x4, scoped, tag = 'scoped memory for tpu_custom_call.1']
    #allocation6 [shape = 'u8[49152]{0}', space=vmem, size = 0xc000, scoped, tag = 'input window, operand 1, single buffered']
    #allocation7 [shape = 's32[1]{0}', space=sflag, size = 0x4, scoped, tag = 'scoped memory for tpu_custom_call.1']
    #allocation8 [shape = 'u8[1536]{0}', space=vmem, size = 0x800, scoped, tag = 'input window, operand 2, single buffered']
    #allocation9 [shape = 'u8[4096]{0}', space=vmem, size = 0x1000, scoped, tag = 'output window, operand 0, single buffered']
    #allocation10 [shape = 'u8[65536]{0}', space=vmem, size = 0x10000, scoped, tag = 'output window, operand 1, single buffered']
    #allocation11 [shape = 's32[1]{0}', space=sflag, size = 0x4, scoped, tag = 'scoped memory for tpu_custom_call.1']
    %10 = vsyncpa [#allocation4], 0
    %11 = vsyncpa [#allocation7], 0
    %12 = vsyncpa [#allocation5], 0
    %13 = vsyncpa [#allocation11], 0
    // Predicated region
    $region2: #{tpu_custom_call.1} parent=1 // pred_check
      _
    $region3: #{tpu_custom_call.1} parent=1 // pred_check_branch
      %15 = sbr.rel (0) target = $region5
    $region4: #{tpu_custom_call.1} parent=1 // pred_region
      %s16 = sadd.s32 0, 0
      %18 = vsyncadd [#allocation4], 0
      %s19 = smul.addr %s16, 8
      %s20 = scalar_lea.hbm %s0, %s19
      %s22 = sshll.u32 %s20, 4
      %s23 = int_to_ptr.hbm [resolvable:$true] %s22
      %s24 = sshll.u32 [#allocation3], 4
      %s25 = int_to_ptr.vmem [resolvable:$true] %s24
      %27 = dma.hbm_to_vmem [thread:$0]  %s23, 128, %s25, [#allocation4]
    $region5: #{tpu_custom_call.1} parent=1 // pred_fallthru
      _
    // Predicated region
    $region6: #{tpu_custom_call.1} parent=1 // pred_check
      _
    $region7: #{tpu_custom_call.1} parent=1 // pred_check_branch
      %29 = sbr.rel (0) target = $region9
    $region8: #{tpu_custom_call.1} parent=1 // pred_region
      %31 = vsyncadd [#allocation7], 0
      %s32 = sshll.u32 %s1, 4
      %s33 = int_to_ptr.hbm [resolvable:$true] %s32
      %s34 = sshll.u32 [#allocation6], 4
      %s35 = int_to_ptr.vmem [resolvable:$true] %s34
      %40 = dma.hbm_to_vmem [thread:$0]  %s33, 1536, %s35, [#allocation7], 384, 384, 24
    $region9: #{tpu_custom_call.1} parent=1 // pred_fallthru
      _
    // Predicated region
    $region10: #{tpu_custom_call.1} parent=1 // pred_check
      _
    $region11: #{tpu_custom_call.1} parent=1 // pred_check_branch
      %42 = sbr.rel (0) target = $region13
    $region12: #{tpu_custom_call.1} parent=1 // pred_region
      %44 = vsyncadd [#allocation7], 0
      %s46 = sshll.u32 %s2, 4
      %s47 = int_to_ptr.hbm [resolvable:$true] %s46
      %s48 = sshll.u32 [#allocation8], 4
      %s49 = int_to_ptr.vmem [resolvable:$true] %s48
      %51 = dma.hbm_to_vmem [thread:$0]  %s47, 48, %s49, [#allocation7]
    $region13: #{tpu_custom_call.1} parent=1 // pred_fallthru
      _
    // Predicated region
    $region14: #{tpu_custom_call.1} parent=1 // pred_check
      _
    $region15: #{tpu_custom_call.1} parent=1 // pred_check_branch
      %53 = sbr.rel (0) target = $region17
    $region16: #{tpu_custom_call.1} parent=1 // pred_region
      %55 = dma.done [#allocation4], 128
    $region17: #{tpu_custom_call.1} parent=1 // pred_fallthru
      _
    // Predicated region
    $region18: #{tpu_custom_call.1} parent=1 // pred_check
      _
    $region19: #{tpu_custom_call.1} parent=1 // pred_check_branch
      %57 = sbr.rel (0) target = $region21
    $region20: #{tpu_custom_call.1} parent=1 // pred_region
      %59 = dma.done [#allocation7], 1536
    $region21: #{tpu_custom_call.1} parent=1 // pred_fallthru
      _
    // Predicated region
    $region22: #{tpu_custom_call.1} parent=1 // pred_check
      _
    $region23: #{tpu_custom_call.1} parent=1 // pred_check_branch
      %61 = sbr.rel (0) target = $region25
    $region24: #{tpu_custom_call.1} parent=1 // pred_region
      %63 = dma.done [#allocation7], 48
    $region25: #{tpu_custom_call.1} parent=1 // pred_fallthru
      _
    %s64 = sadd.s32 0, 0
    %s65 = sadd.s32 0, 0
    %p66 = scmp.eq.s32.totalorder 0, 0
    // Predicated region
    $region26: #{tpu_custom_call.1} parent=1 // pred_check
      %p67 = pneg %p66
    $region27: #{tpu_custom_call.1} parent=1 // pred_check_branch
      %69 = sbr.rel (%p67) target = $region29
    $region28: #{tpu_custom_call.1} parent=1 // pred_region
      %70 = vst [vmem:[#allocation2] sm:$0xff] 0.0
      %71 = vst [vmem:[#allocation2 + $0x8] sm:$0xff] 0.0
      %72 = vst [vmem:[#allocation2 + $0x10] sm:$0xff] 0.0
      %73 = vst [vmem:[#allocation2 + $0x18] sm:$0xff] 0.0
      %74 = vst [vmem:[#allocation2 + $0x20] sm:$0xff] 0.0
      %75 = vst [vmem:[#allocation2 + $0x28] sm:$0xff] 0.0
      %76 = vst [vmem:[#allocation2 + $0x30] sm:$0xff] 0.0
      %77 = vst [vmem:[#allocation2 + $0x38] sm:$0xff] 0.0
      %78 = vst [vmem:[#allocation2 + $0x40] sm:$0xff] 0.0
      %79 = vst [vmem:[#allocation2 + $0x48] sm:$0xff] 0.0
      %80 = vst [vmem:[#allocation2 + $0x50] sm:$0xff] 0.0
      %81 = vst [vmem:[#allocation2 + $0x58] sm:$0xff] 0.0
      %82 = vst [vmem:[#allocation2 + $0x60] sm:$0xff] 0.0
      %83 = vst [vmem:[#allocation2 + $0x68] sm:$0xff] 0.0
      %84 = vst [vmem:[#allocation2 + $0x70] sm:$0xff] 0.0
      %85 = vst [vmem:[#allocation2 + $0x78] sm:$0xff] 0.0
    $region29: #{tpu_custom_call.1} parent=1 // pred_fallthru
      _
    %v86 = vld [vmem:[#allocation3] sm:$0xff]
    %v87 = vld [vmem:[#allocation6] sm:$0xff]
    %v88 = vld [vmem:[#allocation6 + $0x8] sm:$0xff]
    %v89 = vld [vmem:[#allocation6 + $0x10] sm:$0xff]
    %v90 = vld [vmem:[#allocation6 + $0x18] sm:$0xff]
    %v91 = vld [vmem:[#allocation6 + $0x20] sm:$0xff]
    %v92 = vld [vmem:[#allocation6 + $0x28] sm:$0xff]
    %v93 = vld [vmem:[#allocation6 + $0x30] sm:$0xff]
    %v94 = vld [vmem:[#allocation6 + $0x38] sm:$0xff]
    %v95 = vld [vmem:[#allocation6 + $0x40] sm:$0xff]
    %v96 = vld [vmem:[#allocation6 + $0x48] sm:$0xff]
    %v97 = vld [vmem:[#allocation6 + $0x50] sm:$0xff]
    %v98 = vld [vmem:[#allocation6 + $0x58] sm:$0xff]
    %v99 = vld [vmem:[#allocation8] sm:$0x7]
    %v101 = vperm.slane %v99, 0
    %v102 = vperm.slane %v99, 1
    %v103 = vperm.slane %v99, 2
    %vm107 = vcmask 261120
    %v109 = vsel %vm107, %v86, 0
    %111 = vmatpush.msra.mxu0 0.0
    %112 = vmatpush.msra.mxu0 0.0
    %113 = vmatpush.msra.mxu0 0.0
    %114 = vmatpush.msra.mxu0 0.0
    %115 = vmatpush.msra.mxu0 0.0
    %116 = vmatpush.msra.mxu0 0.0
    %117 = vmatpush.msra.mxu0 0.0
    %118 = vmatpush.msra.mxu0 0.0
    %119 = vmatpush.msra.mxu0 0.0
    %120 = vmatpush.msra.mxu0 0.0
    %121 = vmatpush.msra.mxu0 0.0
    %122 = vmatpush.msra.mxu0 0.0
    %123 = vmatpush.msra.mxu0 %v96
    %124 = vmatpush.msra.mxu0 %v93
    %125 = vmatpush.msra.mxu0 %v90
    %126 = vmatpush.msra.mxu0 %v87
    %127 = vmatmul.f32.gmra.mxu0 %v109
    %v128 = vpop.f32.mrf.mxu0
    %v129 = vadd.f32 %v101, %v128
    %130 = vdwg.mxu0
    %131 = vmatpush.msra.mxu0 0.0
    %132 = vmatpush.msra.mxu0 0.0
    %133 = vmatpush.msra.mxu0 0.0
    %134 = vmatpush.msra.mxu0 0.0
    %135 = vmatpush.msra.mxu0 0.0
    %136 = vmatpush.msra.mxu0 0.0
    %137 = vmatpush.msra.mxu0 0.0
    %138 = vmatpush.msra.mxu0 0.0
    %139 = vmatpush.msra.mxu0 0.0
    %140 = vmatpush.msra.mxu0 0.0
    %141 = vmatpush.msra.mxu0 0.0
    %142 = vmatpush.msra.mxu0 0.0
    %143 = vmatpush.msra.mxu0 %v97
    %144 = vmatpush.msra.mxu0 %v94
    %145 = vmatpush.msra.mxu0 %v91
    %146 = vmatpush.msra.mxu0 %v88
    %147 = vmatmul.f32.gmra.mxu0 %v109
    %v148 = vpop.f32.mrf.mxu0
    %v149 = vadd.f32 %v102, %v148
    %150 = vdwg.mxu0
    %151 = vmatpush.msra.mxu0 0.0
    %152 = vmatpush.msra.mxu0 0.0
    %153 = vmatpush.msra.mxu0 0.0
    %154 = vmatpush.msra.mxu0 0.0
    %155 = vmatpush.msra.mxu0 0.0
    %156 = vmatpush.msra.mxu0 0.0
    %157 = vmatpush.msra.mxu0 0.0
    %158 = vmatpush.msra.mxu0 0.0
    %159 = vmatpush.msra.mxu0 0.0
    %160 = vmatpush.msra.mxu0 0.0
    %161 = vmatpush.msra.mxu0 0.0
    %162 = vmatpush.msra.mxu0 0.0
    %163 = vmatpush.msra.mxu0 %v98
    %164 = vmatpush.msra.mxu0 %v95
    %165 = vmatpush.msra.mxu0 %v92
    %166 = vmatpush.msra.mxu0 %v89
    %167 = vmatmul.f32.gmra.mxu0 %v109
    %v168 = vpop.f32.mrf.mxu0
    %v169 = vadd.f32 %v103, %v168
    %170 = vdwg.mxu0
    %171 = vst [vmem:[#allocation9] sm:$0xff] %v169
    %v172 = vld [vmem:[#allocation2] sm:$0xff]
    %v173 = vld [vmem:[#allocation2 + $0x8] sm:$0xff]
    %v174 = vld [vmem:[#allocation2 + $0x10] sm:$0xff]
    %v175 = vld [vmem:[#allocation2 + $0x18] sm:$0xff]
    %v176 = vld [vmem:[#allocation2 + $0x20] sm:$0xff]
    %v177 = vld [vmem:[#allocation2 + $0x28] sm:$0xff]
    %v178 = vld [vmem:[#allocation2 + $0x30] sm:$0xff]
    %v179 = vld [vmem:[#allocation2 + $0x38] sm:$0xff]
    %v180 = vld [vmem:[#allocation2 + $0x40] sm:$0xff]
    %v181 = vld [vmem:[#allocation2 + $0x48] sm:$0xff]
    %v182 = vld [vmem:[#allocation2 + $0x50] sm:$0xff]
    %v183 = vld [vmem:[#allocation2 + $0x58] sm:$0xff]
    %v184 = vld [vmem:[#allocation2 + $0x60] sm:$0xff]
    %v185 = vld [vmem:[#allocation2 + $0x68] sm:$0xff]
    %v186 = vld [vmem:[#allocation2 + $0x70] sm:$0xff]
    %v187 = vld [vmem:[#allocation2 + $0x78] sm:$0xff]
    %188 = vxpose.xlu0.b32.start [1/16] %v129, 128
    %189 = vxpose.xlu0.b32.cont [2/16] 0.0, 128
    %190 = vxpose.xlu0.b32.cont [3/16] 0.0, 128
    %191 = vxpose.xlu0.b32.cont [4/16] 0.0, 128
    %192 = vxpose.xlu0.b32.cont [5/16] 0.0, 128
    %193 = vxpose.xlu0.b32.cont [6/16] 0.0, 128
    %194 = vxpose.xlu0.b32.cont [7/16] 0.0, 128
    %195 = vxpose.xlu0.b32.cont [8/16] 0.0, 128
    %196 = vxpose.xlu0.b32.cont [9/16] 0.0, 128
    %197 = vxpose.xlu0.b32.cont [10/16] 0.0, 128
    %198 = vxpose.xlu0.b32.cont [11/16] 0.0, 128
    %199 = vxpose.xlu0.b32.cont [12/16] 0.0, 128
    %200 = vxpose.xlu0.b32.cont [13/16] 0.0, 128
    %201 = vxpose.xlu0.b32.cont [14/16] 0.0, 128
    %202 = vxpose.xlu0.b32.cont [15/16] 0.0, 128
    %203 = vxpose.xlu0.b32.end [16/16] 0.0, 128
    %v204 = vpop.trf.xlu0
    %v205 = vpop.trf.xlu0
    %v206 = vpop.trf.xlu0
    %v207 = vpop.trf.xlu0
    %v208 = vpop.trf.xlu0
    %v209 = vpop.trf.xlu0
    %v210 = vpop.trf.xlu0
    %v211 = vpop.trf.xlu0
    %v212 = vpop.trf.xlu0
    %v213 = vpop.trf.xlu0
    %v214 = vpop.trf.xlu0
    %v215 = vpop.trf.xlu0
    %v216 = vpop.trf.xlu0
    %v217 = vpop.trf.xlu0
    %v218 = vpop.trf.xlu0
    %v219 = vpop.trf.xlu0
    %vm220 = vcmask 64512
    %v222 = vsel %vm220, %v204, 0
    %v225 = vsel %vm220, %v205, 0
    %v228 = vsel %vm220, %v206, 0
    %v231 = vsel %vm220, %v207, 0
    %v234 = vsel %vm220, %v208, 0
    %v237 = vsel %vm220, %v209, 0
    %v240 = vsel %vm220, %v210, 0
    %v243 = vsel %vm220, %v211, 0
    %v246 = vsel %vm220, %v212, 0
    %v249 = vsel %vm220, %v213, 0
    %v252 = vsel %vm220, %v214, 0
    %v255 = vsel %vm220, %v215, 0
    %v258 = vsel %vm220, %v216, 0
    %v261 = vsel %vm220, %v217, 0
    %v264 = vsel %vm220, %v218, 0
    %v267 = vsel %vm220, %v219, 0
    %269 = vmatpush.msra.mxu0 0.0
    %270 = vmatpush.msra.mxu0 0.0
    %271 = vmatpush.msra.mxu0 0.0
    %272 = vmatpush.msra.mxu0 0.0
    %273 = vmatpush.msra.mxu0 0.0
    %274 = vmatpush.msra.mxu0 0.0
    %275 = vmatpush.msra.mxu0 0.0
    %276 = vmatpush.msra.mxu0 0.0
    %277 = vmatpush.msra.mxu0 0.0
    %278 = vmatpush.msra.mxu0 0.0
    %279 = vmatpush.msra.mxu0 0.0
    %280 = vmatpush.msra.mxu0 0.0
    %281 = vmatpush.msra.mxu0 0.0
    %282 = vmatpush.msra.mxu0 0.0
    %283 = vmatpush.msra.mxu0 0.0
    %284 = vmatpush.msra.mxu0 %v149
    %285 = vmatmul.f32.gmra.mxu0 %v222
    %v286 = vpop.f32.mrf.mxu0
    %v287 = vadd.f32 0.0, %v286
    %288 = vmatmul.f32.gmra.mxu0 %v225
    %v289 = vpop.f32.mrf.mxu0
    %v290 = vadd.f32 0.0, %v289
    %291 = vmatmul.f32.gmra.mxu0 %v228
    %v292 = vpop.f32.mrf.mxu0
    %v293 = vadd.f32 0.0, %v292
    %294 = vmatmul.f32.gmra.mxu0 %v231
    %v295 = vpop.f32.mrf.mxu0
    %v296 = vadd.f32 0.0, %v295
    %297 = vmatmul.f32.gmra.mxu0 %v234
    %v298 = vpop.f32.mrf.mxu0
    %v299 = vadd.f32 0.0, %v298
    %300 = vmatmul.f32.gmra.mxu0 %v237
    %v301 = vpop.f32.mrf.mxu0
    %v302 = vadd.f32 0.0, %v301
    %303 = vmatmul.f32.gmra.mxu0 %v240
    %v304 = vpop.f32.mrf.mxu0
    %v305 = vadd.f32 0.0, %v304
    %306 = vmatmul.f32.gmra.mxu0 %v243
    %v307 = vpop.f32.mrf.mxu0
    %v308 = vadd.f32 0.0, %v307
    %309 = vmatmul.f32.gmra.mxu0 %v246
    %v310 = vpop.f32.mrf.mxu0
    %v311 = vadd.f32 0.0, %v310
    %312 = vmatmul.f32.gmra.mxu0 %v249
    %v313 = vpop.f32.mrf.mxu0
    %v314 = vadd.f32 0.0, %v313
    %315 = vmatmul.f32.gmra.mxu0 %v252
    %v316 = vpop.f32.mrf.mxu0
    %v317 = vadd.f32 0.0, %v316
    %318 = vmatmul.f32.gmra.mxu0 %v255
    %v319 = vpop.f32.mrf.mxu0
    %v320 = vadd.f32 0.0, %v319
    %321 = vmatmul.f32.gmra.mxu0 %v258
    %v322 = vpop.f32.mrf.mxu0
    %v323 = vadd.f32 0.0, %v322
    %324 = vmatmul.f32.gmra.mxu0 %v261
    %v325 = vpop.f32.mrf.mxu0
    %v326 = vadd.f32 0.0, %v325
    %327 = vmatmul.f32.gmra.mxu0 %v264
    %v328 = vpop.f32.mrf.mxu0
    %v329 = vadd.f32 0.0, %v328
    %330 = vmatmul.f32.gmra.mxu0 %v267
    %v331 = vpop.f32.mrf.mxu0
    %v332 = vadd.f32 0.0, %v331
    %333 = vdwg.mxu0
    %v334 = vadd.f32 %v172, %v287
    %v335 = vadd.f32 %v173, %v290
    %v336 = vadd.f32 %v174, %v293
    %v337 = vadd.f32 %v175, %v296
    %v338 = vadd.f32 %v176, %v299
    %v339 = vadd.f32 %v177, %v302
    %v340 = vadd.f32 %v178, %v305
    %v341 = vadd.f32 %v179, %v308
    %v342 = vadd.f32 %v180, %v311
    %v343 = vadd.f32 %v181, %v314
    %v344 = vadd.f32 %v182, %v317
    %v345 = vadd.f32 %v183, %v320
    %v346 = vadd.f32 %v184, %v323
    %v347 = vadd.f32 %v185, %v326
    %v348 = vadd.f32 %v186, %v329
    %v349 = vadd.f32 %v187, %v332
    %350 = vst [vmem:[#allocation2] sm:$0xff] %v334
    %351 = vst [vmem:[#allocation2 + $0x8] sm:$0xff] %v335
    %352 = vst [vmem:[#allocation2 + $0x10] sm:$0xff] %v336
    %353 = vst [vmem:[#allocation2 + $0x18] sm:$0xff] %v337
    %354 = vst [vmem:[#allocation2 + $0x20] sm:$0xff] %v338
    %355 = vst [vmem:[#allocation2 + $0x28] sm:$0xff] %v339
    %356 = vst [vmem:[#allocation2 + $0x30] sm:$0xff] %v340
    %357 = vst [vmem:[#allocation2 + $0x38] sm:$0xff] %v341
    %358 = vst [vmem:[#allocation2 + $0x40] sm:$0xff] %v342
    %359 = vst [vmem:[#allocation2 + $0x48] sm:$0xff] %v343
    %360 = vst [vmem:[#allocation2 + $0x50] sm:$0xff] %v344
    %361 = vst [vmem:[#allocation2 + $0x58] sm:$0xff] %v345
    %362 = vst [vmem:[#allocation2 + $0x60] sm:$0xff] %v346
    %363 = vst [vmem:[#allocation2 + $0x68] sm:$0xff] %v347
    %364 = vst [vmem:[#allocation2 + $0x70] sm:$0xff] %v348
    %365 = vst [vmem:[#allocation2 + $0x78] sm:$0xff] %v349
    // Predicated region
    $region30: #{tpu_custom_call.1} parent=1 // pred_check
      %p366 = pneg %p66
    $region31: #{tpu_custom_call.1} parent=1 // pred_check_branch
      %368 = sbr.rel (%p366) target = $region33
    $region32: #{tpu_custom_call.1} parent=1 // pred_region
      %v369 = vld [vmem:[#allocation2] sm:$0xff]
      %v370 = vld [vmem:[#allocation2 + $0x8] sm:$0xff]
      %v371 = vld [vmem:[#allocation2 + $0x10] sm:$0xff]
      %v372 = vld [vmem:[#allocation2 + $0x18] sm:$0xff]
      %v373 = vld [vmem:[#allocation2 + $0x20] sm:$0xff]
      %v374 = vld [vmem:[#allocation2 + $0x28] sm:$0xff]
      %v375 = vld [vmem:[#allocation2 + $0x30] sm:$0xff]
      %v376 = vld [vmem:[#allocation2 + $0x38] sm:$0xff]
      %v377 = vld [vmem:[#allocation2 + $0x40] sm:$0xff]
      %v378 = vld [vmem:[#allocation2 + $0x48] sm:$0xff]
      %v379 = vld [vmem:[#allocation2 + $0x50] sm:$0xff]
      %v380 = vld [vmem:[#allocation2 + $0x58] sm:$0xff]
      %v381 = vld [vmem:[#allocation2 + $0x60] sm:$0xff]
      %v382 = vld [vmem:[#allocation2 + $0x68] sm:$0xff]
      %v383 = vld [vmem:[#allocation2 + $0x70] sm:$0xff]
      %v384 = vld [vmem:[#allocation2 + $0x78] sm:$0xff]
      %385 = vst [vmem:[#allocation10] sm:$0xff] %v369
      %386 = vst [vmem:[#allocation10 + $0x8] sm:$0xff] %v370
      %387 = vst [vmem:[#allocation10 + $0x10] sm:$0xff] %v371
      %388 = vst [vmem:[#allocation10 + $0x18] sm:$0xff] %v372
      %389 = vst [vmem:[#allocation10 + $0x20] sm:$0xff] %v373
      %390 = vst [vmem:[#allocation10 + $0x28] sm:$0xff] %v374
      %391 = vst [vmem:[#allocation10 + $0x30] sm:$0xff] %v375
      %392 = vst [vmem:[#allocation10 + $0x38] sm:$0xff] %v376
      %393 = vst [vmem:[#allocation10 + $0x40] sm:$0xff] %v377
      %394 = vst [vmem:[#allocation10 + $0x48] sm:$0xff] %v378
      %395 = vst [vmem:[#allocation10 + $0x50] sm:$0xff] %v379
      %396 = vst [vmem:[#allocation10 + $0x58] sm:$0xff] %v380
      %397 = vst [vmem:[#allocation10 + $0x60] sm:$0xff] %v381
      %398 = vst [vmem:[#allocation10 + $0x68] sm:$0xff] %v382
      %399 = vst [vmem:[#allocation10 + $0x70] sm:$0xff] %v383
      %400 = vst [vmem:[#allocation10 + $0x78] sm:$0xff] %v384
    $region33: #{tpu_custom_call.1} parent=1 // pred_fallthru
      _
    // Predicated region
    $region34: #{tpu_custom_call.1} parent=1 // pred_check
      _
    $region35: #{tpu_custom_call.1} parent=1 // pred_check_branch
      %402 = sbr.rel (0) target = $region37
    $region36: #{tpu_custom_call.1} parent=1 // pred_region
      %s403 = sadd.s32 0, 0
      %405 = vsyncadd [#allocation5], 0
      %s406 = smul.addr %s403, 8
      %s407 = scalar_lea.hbm %s3, %s406
      %s409 = sshll.u32 [#allocation9], 4
      %s410 = int_to_ptr.vmem [resolvable:$true] %s409
      %s411 = sshll.u32 %s407, 4
      %s412 = int_to_ptr.hbm [resolvable:$true] %s411
      %414 = dma.vmem_to_hbm [thread:$0]  %s410, 128, %s412, [#allocation5]
    $region37: #{tpu_custom_call.1} parent=1 // pred_fallthru
      _
    // Predicated region
    $region38: #{tpu_custom_call.1} parent=1 // pred_check
      _
    $region39: #{tpu_custom_call.1} parent=1 // pred_check_branch
      %416 = sbr.rel (0) target = $region41
    $region40: #{tpu_custom_call.1} parent=1 // pred_region
      %418 = vsyncadd [#allocation11], 0
      %s419 = sshll.u32 [#allocation10], 4
      %s420 = int_to_ptr.vmem [resolvable:$true] %s419
      %s421 = sshll.u32 %s4, 4
      %s422 = int_to_ptr.hbm [resolvable:$true] %s421
      %427 = dma.vmem_to_hbm [thread:$0]  %s420, 2048, %s422, [#allocation11], 128, 128, 8
    $region41: #{tpu_custom_call.1} parent=1 // pred_fallthru
      _
    // Predicated region
    $region42: #{tpu_custom_call.1} parent=1 // pred_check
      _
    $region43: #{tpu_custom_call.1} parent=1 // pred_check_branch
      %429 = sbr.rel (0) target = $region45
    $region44: #{tpu_custom_call.1} parent=1 // pred_region
      %431 = dma.done [#allocation5], 128
    $region45: #{tpu_custom_call.1} parent=1 // pred_fallthru
      _
    // Predicated region
    $region46: #{tpu_custom_call.1} parent=1 // pred_check
      _
    $region47: #{tpu_custom_call.1} parent=1 // pred_check_branch
      %433 = sbr.rel (0) target = $region49
    $region48: #{tpu_custom_call.1} parent=1 // pred_region
      %435 = dma.done [#allocation11], 2048
    $region49: #{tpu_custom_call.1} parent=1 // pred_fallthru
      _
    %436 = vsyncpa [#allocation4], 1
    %437 = vsyncpa [#allocation7], 1
    %438 = vsyncpa [#allocation5], 1
    %439 = vsyncpa [#allocation11], 1

</llo_original>
